<compile_context>
chip_gen: v7x
topology: tpu7x:2x2x1
jax: 0.10.0
libtpu: 0.0.40
codegen_flags: <defaults>
</compile_context>

<pallas_src>
import functools

import jax
import jax.numpy as jnp
from jax.experimental import pallas as pl
from jax.experimental.pallas import tpu as pltpu


def _round_up(x: int, m: int) -> int:
    return (x + m - 1) // m * m


def atomic_conv_kernel(atom_ref, nbry_ref, w1_ref, w2_ref, b_ref, out_ref,
                       *, M: int, F: int):
    """One atom tile of AtomicConvLayer.

    atom_ref : (TN, F)      atom features (f32)
    nbry_ref : (M, TN, F)   pre-projected gathered neighbor features Y[nbr]
    w1_ref   : (F, 2F)      [mW1a | uW1a]             (x @ W layout, compute dtype)
    w2_ref   : (3F, F)      [mW2 ; uW1b ; uW2]        (x @ W layout, compute dtype)
    b_ref    : (4, F)       [mb1 ; M*mb2 ; ub1 ; ub2] (f32)
    out_ref  : (TN, F)
    """
    cdt = w1_ref.dtype

    def dot(a, w):
        return jnp.dot(a.astype(cdt), w, preferred_element_type=jnp.float32)

    atom = atom_ref[...]                                   # (TN, F) f32
    b = b_ref[...]                                         # (4, F)
    mb1, aggb, ub1, ub2 = b[0:1], b[1:2], b[2:3], b[3:4]

    # Fused atom-side first layers of message_net and update_net: a single
    # (TN, F) @ (F, 2F) dot fills twice the MXU columns of two F-wide dots.
    both = dot(atom, w1_ref[...])                          # (TN, 2F) f32
    part_a = both[:, :F] + mb1                             # message_net atom half
    part_u = both[:, F:]                                   # update_net atom half

    # h1_j = relu(atom@mW1a + Y[nbr_j] + mb1); sum over neighbors on the VPU.
    h1_sum = jnp.maximum(part_a + nbry_ref[0], 0.0)
    for j in range(1, M):                                  # static unroll, M small
        h1_sum = h1_sum + jnp.maximum(part_a + nbry_ref[j], 0.0)

    # sum_j (h1_j @ mW2 + mb2) == (sum_j h1_j) @ mW2 + M*mb2   (linear -> exact)
    aggregated = dot(h1_sum, w2_ref[0 * F:1 * F, :]) + aggb

    # update_net on cat([atom, aggregated], -1), split-weight form.
    u_h = jnp.maximum(part_u + dot(aggregated, w2_ref[1 * F:2 * F, :]) + ub1, 0.0)
    updated = dot(u_h, w2_ref[2 * F:3 * F, :]) + ub2

    out_ref[...] = jnp.maximum(atom + updated, 0.0)        # residual + ReLU


def atomic_conv_layer(atom_features, nbr_features, nbr_indices, params,
                      *, tile_n=1024, compute_dtype=jnp.float32):
    """Pallas implementation of AtomicConvLayer.forward.

    atom_features: [N, F] float32
    nbr_features:  [N, M, F] (unused by the reference forward pass)
    nbr_indices:   [N, M] int32
    """
    del nbr_features  # the PyTorch forward never uses it
    N, F = atom_features.shape
    M = nbr_indices.shape[1]
    assert F % 8 == 0, "F must be a multiple of 8 for sublane-aligned weight packing"
    # TODO(synk): support arbitrary F by zero-padding the feature axis to a multiple of 8.
    atom_features = atom_features.astype(jnp.float32)
    nbr_indices = nbr_indices.astype(jnp.int32)

    (mW1, mb1, mW2, mb2, uW1, ub1, uW2, ub2) = params
    # PyTorch Linear: y = x @ W.T + b.  Split the 2F-input first layers into
    # atom / neighbor(or aggregated) halves so the kernel never concats lanes.
    mW1t, uW1t = mW1.T, uW1.T                              # (2F, F)
    mW1a, mW1b = mW1t[:F], mW1t[F:]
    uW1a, uW1b = uW1t[:F], uW1t[F:]
    mW2t, uW2t = mW2.T, uW2.T

    # Tile sizing: multiple of 8 sublanes, clamped to the padded atom count,
    # kept small enough that the grid has >= 2 steps (v7x has 2 TensorCores)
    # and that the per-step footprint fits comfortably inside scoped VMEM.
    n8 = _round_up(N, 8)
    tile_n = _round_up(max(8, min(tile_n, n8)), 8)
    if tile_n >= n8 and n8 > 8:                            # keep >= 2 grid steps
        tile_n = _round_up((n8 + 1) // 2, 8)

    nbr_item = jnp.dtype(compute_dtype).itemsize

    def _step_vmem_bytes(t):
        streams = 2 * t * F * (4 + 4 + M * nbr_item)       # double-buffered atom/out/nbr
        interm = 8 * t * F * 4                             # element-wise f32 intermediates
        weights = (2 * F * F + 3 * F * F) * nbr_item + 4 * F * 4
        return streams + interm + weights

    vmem_budget = 24 * 1024 * 1024                         # headroom under 32 MiB scoped (v7x-safe)
    while tile_n > 8 and _step_vmem_bytes(tile_n) > vmem_budget:
        tile_n = _round_up(tile_n // 2, 8)
    Np = _round_up(N, tile_n)

    # Pad the SMALL per-atom arrays before the gather so the big (M, Np, F)
    # neighbor stream is written exactly once (no post-gather pad/transpose).
    if Np != N:
        atom_p = jnp.pad(atom_features, ((0, Np - N), (0, 0)))
        idx_p = jnp.pad(nbr_indices, ((0, Np - N), (0, 0)))    # padded rows -> atom 0
    else:
        atom_p, idx_p = atom_features, nbr_indices

    # Hoisted neighbor-side projection: compute Y once per atom, then gather
    # rows of Y directly into neighbor-major (M, Np, F) layout (no transpose).
    # TODO(synk): a true in-kernel gather (scalar-prefetched nbr_indices with Y
    # resident in VMEM or DMA-gathered from HBM) would also remove this one
    # remaining HBM write of the (M, Np, F) stream.
    Y = atom_p @ mW1b                                          # (Np, F)
    nbr_y = jnp.take(Y, idx_p.T.reshape(-1), axis=0)           # (M*Np, F), nbr-major
    nbr_y = nbr_y.reshape(M, Np, F).astype(compute_dtype)

    # Pack weights / biases -> few wide input streams; pre-cast to compute dtype.
    w1_pack = jnp.concatenate([mW1a, uW1a], axis=1).astype(compute_dtype)        # (F, 2F)
    w2_pack = jnp.concatenate([mW2t, uW1b, uW2t], axis=0).astype(compute_dtype)  # (3F, F)
    b_pack = jnp.stack([mb1, M * mb2, ub1, ub2], axis=0).astype(jnp.float32)     # (4, F)

    kernel = functools.partial(atomic_conv_kernel, M=M, F=F)
    grid = (Np // tile_n,)
    full = lambda i: (0, 0)

    # TODO(synk): for F << 128 an atoms-on-lanes (F, N) layout would make the
    # M-loop adds and the output store lane-dense, but it would reintroduce a
    # full host-side transpose of the dominant (M, N, F) stream; kept row-major.
    out = pl.pallas_call(
        kernel,
        out_shape=jax.ShapeDtypeStruct((Np, F), jnp.float32),
        grid_spec=pltpu.PrefetchScalarGridSpec(
            num_scalar_prefetch=0,
            grid=grid,
            in_specs=[
                pl.BlockSpec((tile_n, F), lambda i: (i, 0)),        # atom tile
                pl.BlockSpec((M, tile_n, F), lambda i: (0, i, 0)),  # nbr Y tile
                pl.BlockSpec((F, 2 * F), full),                     # packed W1
                pl.BlockSpec((3 * F, F), full),                     # packed W2
                pl.BlockSpec((4, F), full),                         # packed b
            ],
            out_specs=pl.BlockSpec((tile_n, F), lambda i: (i, 0)),
        ),
        compiler_params=pltpu.CompilerParams(
            dimension_semantics=("parallel",),
            vmem_limit_bytes=32 * 1024 * 1024),
    )(atom_p, nbr_y, w1_pack, w2_pack, b_pack)
    return out[:N]


def init_params(key, F):
    """Deterministic PyTorch-Linear-style init: U(-1/sqrt(fan_in), 1/sqrt(fan_in))."""
    ks = jax.random.split(key, 8)

    def lin(kw, kb, fan_in, fan_out):
        bound = 1.0 / jnp.sqrt(fan_in)
        W = jax.random.uniform(kw, (fan_out, fan_in), jnp.float32, -bound, bound)
        b = jax.random.uniform(kb, (fan_out,), jnp.float32, -bound, bound)
        return W, b

    mW1, mb1 = lin(ks[0], ks[1], 2 * F, F)
    mW2, mb2 = lin(ks[2], ks[3], F, F)
    uW1, ub1 = lin(ks[4], ks[5], 2 * F, F)
    uW2, ub2 = lin(ks[6], ks[7], F, F)
    return (mW1, mb1, mW2, mb2, uW1, ub1, uW2, ub2)


def reference_forward(atom_features, nbr_indices, params):
    """Pure-JAX reference mirroring the PyTorch module."""
    (mW1, mb1, mW2, mb2, uW1, ub1, uW2, ub2) = params
    N, F = atom_features.shape
    M = nbr_indices.shape[1]
    nbr_fea = atom_features[nbr_indices.reshape(-1)].reshape(N, M, F)
    atom_exp = jnp.broadcast_to(atom_features[:, None, :], (N, M, F))
    combined = jnp.concatenate([atom_exp, nbr_fea], axis=-1)
    h = jnp.maximum(combined @ mW1.T + mb1, 0.0)
    messages = h @ mW2.T + mb2
    agg = messages.sum(axis=1)
    upd_in = jnp.concatenate([atom_features, agg], axis=-1)
    uh = jnp.maximum(upd_in @ uW1.T + ub1, 0.0)
    updated = uh @ uW2.T + ub2
    return jnp.maximum(atom_features + updated, 0.0)


if __name__ == "__main__":
    N_atoms, max_neighbors, atom_fea_len = 16, 4, 32

    key = jax.random.PRNGKey(0)
    k_atom, k_nbrf, k_idx, k_params = jax.random.split(key, 4)

    atom_features = jax.random.normal(k_atom, (N_atoms, atom_fea_len), jnp.float32)
    nbr_features = jax.random.normal(
        k_nbrf, (N_atoms, max_neighbors, atom_fea_len), jnp.float32)  # unused by forward
    nbr_indices = jax.random.randint(
        k_idx, (N_atoms, max_neighbors), 0, N_atoms, jnp.int32)

    params = init_params(k_params, atom_fea_len)

    out = atomic_conv_layer(atom_features, nbr_features, nbr_indices, params)
    out = jax.block_until_ready(out)

    ref = reference_forward(atom_features, nbr_indices, params)
    assert jnp.allclose(out, ref, atol=1e-5, rtol=1e-5), "mismatch vs reference"

    print("KERNEL_OK")
</pallas_src>

<mosaic_0001>
module attributes {stable_mosaic.version = 11 : i64} {
  func.func @atomic_conv_kernel(%arg0: i32, %arg1: memref<8x32xf32, #tpu.memory_space<vmem>>, %arg2: memref<4x8x32xf32, #tpu.memory_space<vmem>>, %arg3: memref<32x64xf32, #tpu.memory_space<vmem>>, %arg4: memref<96x32xf32, #tpu.memory_space<vmem>>, %arg5: memref<4x32xf32, #tpu.memory_space<vmem>>, %arg6: memref<8x32xf32, #tpu.memory_space<vmem>>) attributes {dimension_semantics = [#tpu.dimension_semantics<parallel>], iteration_bounds = array<i64: 2>, scalar_prefetch = 0 : i64, scratch_operands = 0 : i64, tpu.core_type = #tpu.core_type<tc>, window_params = [{transform_indices = @transform_0, window_bounds = array<i64: 8, 32>}, {transform_indices = @transform_1, window_bounds = array<i64: 4, 8, 32>}, {pipeline_mode = #tpu.pipeline_mode<synchronous>, transform_indices = @transform_2, window_bounds = array<i64: 32, 64>}, {pipeline_mode = #tpu.pipeline_mode<synchronous>, transform_indices = @transform_3, window_bounds = array<i64: 96, 32>}, {pipeline_mode = #tpu.pipeline_mode<synchronous>, transform_indices = @transform_4, window_bounds = array<i64: 4, 32>}, {transform_indices = @transform_5, window_bounds = array<i64: 8, 32>}]} {
    %c0 = arith.constant 0 : index
    %c0_0 = arith.constant 0 : index
    %0 = vector.load %arg1[%c0, %c0_0] : memref<8x32xf32, #tpu.memory_space<vmem>>, vector<8x32xf32>
    %c0_1 = arith.constant 0 : index
    %c0_2 = arith.constant 0 : index
    %1 = vector.load %arg5[%c0_1, %c0_2] : memref<4x32xf32, #tpu.memory_space<vmem>>, vector<4x32xf32>
    %2 = vector.extract_strided_slice %1 {offsets = [0, 0], sizes = [1, 32], strides = [1, 1]} : vector<4x32xf32> to vector<1x32xf32>
    %3 = vector.extract_strided_slice %1 {offsets = [1, 0], sizes = [1, 32], strides = [1, 1]} : vector<4x32xf32> to vector<1x32xf32>
    %4 = vector.extract_strided_slice %1 {offsets = [2, 0], sizes = [1, 32], strides = [1, 1]} : vector<4x32xf32> to vector<1x32xf32>
    %5 = vector.extract_strided_slice %1 {offsets = [3, 0], sizes = [1, 32], strides = [1, 1]} : vector<4x32xf32> to vector<1x32xf32>
    %c0_3 = arith.constant 0 : index
    %c0_4 = arith.constant 0 : index
    %6 = vector.load %arg3[%c0_3, %c0_4] : memref<32x64xf32, #tpu.memory_space<vmem>>, vector<32x64xf32>
    %cst = arith.constant dense<0.000000e+00> : vector<8x64xf32>
    %7 = tpu.matmul %0, %6, %cst {dimension_numbers = #tpu.dot_dimension_numbers<[1], [0], [0], [1], [0, 0, 1, 1], [], []>} : vector<8x32xf32>, vector<32x64xf32>, vector<8x64xf32> -> vector<8x64xf32>
    %8 = vector.extract_strided_slice %7 {offsets = [0, 0], sizes = [8, 32], strides = [1, 1]} : vector<8x64xf32> to vector<8x32xf32>
    %9 = vector.broadcast %2 : vector<1x32xf32> to vector<8x32xf32>
    %10 = arith.addf %8, %9 : vector<8x32xf32>
    %11 = vector.extract_strided_slice %7 {offsets = [0, 32], sizes = [8, 32], strides = [1, 1]} : vector<8x64xf32> to vector<8x32xf32>
    %c0_5 = arith.constant 0 : index
    %c0_6 = arith.constant 0 : index
    %c0_7 = arith.constant 0 : index
    %12 = vector.load %arg2[%c0_5, %c0_6, %c0_7] : memref<4x8x32xf32, #tpu.memory_space<vmem>>, vector<1x8x32xf32>
    %13 = vector.shape_cast %12 : vector<1x8x32xf32> to vector<8x32xf32>
    %14 = arith.addf %10, %13 : vector<8x32xf32>
    %cst_8 = arith.constant 0.000000e+00 : f32
    %15 = vector.broadcast %cst_8 : f32 to vector<8x32xf32>
    %16 = arith.maximumf %14, %15 : vector<8x32xf32>
    %c1 = arith.constant 1 : index
    %c0_9 = arith.constant 0 : index
    %c0_10 = arith.constant 0 : index
    %17 = vector.load %arg2[%c1, %c0_9, %c0_10] : memref<4x8x32xf32, #tpu.memory_space<vmem>>, vector<1x8x32xf32>
    %18 = vector.shape_cast %17 : vector<1x8x32xf32> to vector<8x32xf32>
    %19 = arith.addf %10, %18 : vector<8x32xf32>
    %cst_11 = arith.constant 0.000000e+00 : f32
    %20 = vector.broadcast %cst_11 : f32 to vector<8x32xf32>
    %21 = arith.maximumf %19, %20 : vector<8x32xf32>
    %22 = arith.addf %16, %21 : vector<8x32xf32>
    %c2 = arith.constant 2 : index
    %c0_12 = arith.constant 0 : index
    %c0_13 = arith.constant 0 : index
    %23 = vector.load %arg2[%c2, %c0_12, %c0_13] : memref<4x8x32xf32, #tpu.memory_space<vmem>>, vector<1x8x32xf32>
    %24 = vector.shape_cast %23 : vector<1x8x32xf32> to vector<8x32xf32>
    %25 = arith.addf %10, %24 : vector<8x32xf32>
    %cst_14 = arith.constant 0.000000e+00 : f32
    %26 = vector.broadcast %cst_14 : f32 to vector<8x32xf32>
    %27 = arith.maximumf %25, %26 : vector<8x32xf32>
    %28 = arith.addf %22, %27 : vector<8x32xf32>
    %c3 = arith.constant 3 : index
    %c0_15 = arith.constant 0 : index
    %c0_16 = arith.constant 0 : index
    %29 = vector.load %arg2[%c3, %c0_15, %c0_16] : memref<4x8x32xf32, #tpu.memory_space<vmem>>, vector<1x8x32xf32>
    %30 = vector.shape_cast %29 : vector<1x8x32xf32> to vector<8x32xf32>
    %31 = arith.addf %10, %30 : vector<8x32xf32>
    %cst_17 = arith.constant 0.000000e+00 : f32
    %32 = vector.broadcast %cst_17 : f32 to vector<8x32xf32>
    %33 = arith.maximumf %31, %32 : vector<8x32xf32>
    %34 = arith.addf %28, %33 : vector<8x32xf32>
    %c0_18 = arith.constant 0 : index
    %c0_19 = arith.constant 0 : index
    %35 = vector.load %arg4[%c0_18, %c0_19] : memref<96x32xf32, #tpu.memory_space<vmem>>, vector<32x32xf32>
    %cst_20 = arith.constant dense<0.000000e+00> : vector<8x32xf32>
    %36 = tpu.matmul %34, %35, %cst_20 {dimension_numbers = #tpu.dot_dimension_numbers<[1], [0], [0], [1], [0, 0, 1, 1], [], []>} : vector<8x32xf32>, vector<32x32xf32>, vector<8x32xf32> -> vector<8x32xf32>
    %37 = vector.broadcast %3 : vector<1x32xf32> to vector<8x32xf32>
    %38 = arith.addf %36, %37 : vector<8x32xf32>
    %c32 = arith.constant 32 : index
    %c0_21 = arith.constant 0 : index
    %39 = vector.load %arg4[%c32, %c0_21] : memref<96x32xf32, #tpu.memory_space<vmem>>, vector<32x32xf32>
    %cst_22 = arith.constant dense<0.000000e+00> : vector<8x32xf32>
    %40 = tpu.matmul %38, %39, %cst_22 {dimension_numbers = #tpu.dot_dimension_numbers<[1], [0], [0], [1], [0, 0, 1, 1], [], []>} : vector<8x32xf32>, vector<32x32xf32>, vector<8x32xf32> -> vector<8x32xf32>
    %41 = arith.addf %11, %40 : vector<8x32xf32>
    %42 = vector.broadcast %4 : vector<1x32xf32> to vector<8x32xf32>
    %43 = arith.addf %41, %42 : vector<8x32xf32>
    %cst_23 = arith.constant 0.000000e+00 : f32
    %44 = vector.broadcast %cst_23 : f32 to vector<8x32xf32>
    %45 = arith.maximumf %43, %44 : vector<8x32xf32>
    %c64 = arith.constant 64 : index
    %c0_24 = arith.constant 0 : index
    %46 = vector.load %arg4[%c64, %c0_24] : memref<96x32xf32, #tpu.memory_space<vmem>>, vector<32x32xf32>
    %cst_25 = arith.constant dense<0.000000e+00> : vector<8x32xf32>
    %47 = tpu.matmul %45, %46, %cst_25 {dimension_numbers = #tpu.dot_dimension_numbers<[1], [0], [0], [1], [0, 0, 1, 1], [], []>} : vector<8x32xf32>, vector<32x32xf32>, vector<8x32xf32> -> vector<8x32xf32>
    %48 = vector.broadcast %5 : vector<1x32xf32> to vector<8x32xf32>
    %49 = arith.addf %47, %48 : vector<8x32xf32>
    %50 = arith.addf %0, %49 : vector<8x32xf32>
    %cst_26 = arith.constant 0.000000e+00 : f32
    %51 = vector.broadcast %cst_26 : f32 to vector<8x32xf32>
    %52 = arith.maximumf %50, %51 : vector<8x32xf32>
    %c0_27 = arith.constant 0 : index
    %c0_28 = arith.constant 0 : index
    %53 = vector.load %arg6[%c0_27, %c0_28] : memref<8x32xf32, #tpu.memory_space<vmem>>, vector<8x32xf32>
    tpu.vector_store %arg6[%c0_27, %c0_28], %52 {strides = array<i32>} : memref<8x32xf32, #tpu.memory_space<vmem>>, vector<8x32xf32>,
    return
  }
  func.func @transform_0(%arg0: i32) -> (i32, i32) {
    %c0_i32 = arith.constant 0 : i32
    %c0_i32_0 = arith.constant 0 : i32
    return %arg0, %c0_i32 : i32, i32
  }
  func.func @transform_1(%arg0: i32) -> (i32, i32, i32) {
    %c0_i32 = arith.constant 0 : i32
    %c0_i32_0 = arith.constant 0 : i32
    %c0_i32_1 = arith.constant 0 : i32
    return %c0_i32, %arg0, %c0_i32_0 : i32, i32, i32
  }
  func.func @transform_2(%arg0: i32) -> (i32, i32) {
    %c0_i32 = arith.constant 0 : i32
    %c0_i32_0 = arith.constant 0 : i32
    %c0_i32_1 = arith.constant 0 : i32
    return %c0_i32, %c0_i32_0 : i32, i32
  }
  func.func @transform_3(%arg0: i32) -> (i32, i32) {
    %c0_i32 = arith.constant 0 : i32
    %c0_i32_0 = arith.constant 0 : i32
    %c0_i32_1 = arith.constant 0 : i32
    return %c0_i32, %c0_i32_0 : i32, i32
  }
  func.func @transform_4(%arg0: i32) -> (i32, i32) {
    %c0_i32 = arith.constant 0 : i32
    %c0_i32_0 = arith.constant 0 : i32
    %c0_i32_1 = arith.constant 0 : i32
    return %c0_i32, %c0_i32_0 : i32, i32
  }
  func.func @transform_5(%arg0: i32) -> (i32, i32) {
    %c0_i32 = arith.constant 0 : i32
    %c0_i32_0 = arith.constant 0 : i32
    return %arg0, %c0_i32 : i32, i32
  }
}

</mosaic_0001>

<llo_original>
// kernel: tpu_custom_call.1
$region0: #{tpu_custom_call.1}
  #allocation0 [shape = 'u32[]', space=smem, size = 0x4, offset = 0x4, fixed_abs, tag = 'smem constant byte address 0x4 - core index']
  #allocation1 [shape = 'u32[144,128]{1,0:T(1,128)}', space=vmem, size = 0x12000, scoped, tag = 'internal scratch']
  %s0 = inlined_call_operand.vmem [shape: f32[16,32], index: 0, kind: input, shape index: {}]
  %s1 = inlined_call_operand.vmem [shape: f32[4,16,32], index: 1, kind: input, shape index: {}]
  %s2 = inlined_call_operand.vmem [shape: f32[32,64], index: 2, kind: input, shape index: {}]
  %s3 = inlined_call_operand.vmem [shape: f32[96,32], index: 3, kind: input, shape index: {}]
  %s4 = inlined_call_operand.vmem [shape: f32[4,32], index: 4, kind: input, shape index: {}]
  %s5 = inlined_call_operand.hbm [shape: f32[16,32], index: 5, kind: output, shape index: {}]
  %s6 = sld [smem:[#allocation0]]
  $region91: #{tpu_custom_call.1} parent=0
    _
  %s8 = ssub.s32 1, %s6
  %s9 = scalar_select 0, %s8, %s6
  $region1: #{tpu_custom_call.1} parent=0
    #allocation2 [shape = 'u8[32768]{0}', space=vmem, size = 0x8000, scoped, tag = 'input window, operand 1']
    #allocation3 [shape = 'u8[8192]{0}', space=vmem, size = 0x2000, scoped, tag = 'output window, operand 0']
    #allocation4 [shape = 's32[2]{0}', space=sflag, size = 0x8, scoped, tag = 'scoped memory for tpu_custom_call.1']
    %10 = vsyncpa [#allocation4], 0
    %s11 = scalar_lea.sflag [#allocation4], 1
    %12 = vsyncpa %s11, 0
    loop: start=0, step=1, limit=4
    $region2: #{tpu_custom_call.1} parent=1 // loop_pre_header
      _
    $region3: #{tpu_custom_call.1} parent=1 // loop_header
      %s14 = sphi 0, %s18
      %p15 = scmp.ge.s32.totalorder %s14, 4
      %s24 = sphi 0, %s26
      %s27 = sphi 0, %s24
      %s28 = sphi 0, %s27
      %s44 = sphi 0, %s28
      %s50 = sphi 0, %s52
      %s53 = sphi 0, %s50
      %s54 = sphi 0, %s53
      %s70 = sphi 0, %s54
      %s74 = sphi 0, %s74
      %s76 = sphi 0, %s74
      %s77 = sphi 0, %s76
      %s91 = sphi 0, %s77
      %s95 = sphi 0, %s95
      %s97 = sphi 0, %s95
      %s98 = sphi 0, %s97
      %s112 = sphi 0, %s98
      %s116 = sphi 0, %s116
      %s118 = sphi 0, %s116
      %s119 = sphi 0, %s118
      %s133 = sphi 0, %s119
      %s139 = sphi 0, %s141
      %s142 = sphi 0, %s139
      %s143 = sphi 0, %s142
      %s159 = sphi 0, %s143
    $region4: #{tpu_custom_call.1} parent=1 // loop_header_branch
      %17 = sbr.rel (%p15) target = $region8
    $region5: #{tpu_custom_call.1} parent=1 // loop_body
      %s19 = ssub.s32 %s14, 1
      %s20 = ssub.s32 %s14, 2
      %s21 = sadd.s32 %s14, 1
      %s22 = ssub.s32 %s14, %s21
      %p23 = scmp.eq.s32.totalorder %s22, 0
      %s25 = sadd.s32 %s24, 1
      %s26 = scalar_select %p23, %s24, %s25
      %p29 = pneg %p23
      %p30 = scmp.eq.s32.totalorder %s14, 1
      %p31 = por %p29, %p30
      %p32 = scmp.ne.s32.totalorder %s24, %s27
      %p33 = scmp.eq.s32.totalorder %s14, 0
      %p34 = por %p32, %p33
      %p35 = scmp.ne.s32.totalorder %s24, %s27
      %p36 = scmp.eq.s32.totalorder %s19, 1
      %p37 = por %p35, %p36
      %p38 = scmp.ne.s32.totalorder %s27, %s28
      %p39 = scmp.eq.s32.totalorder %s19, 0
      %p40 = por %p38, %p39
      %p41 = scmp.ne.s32.totalorder %s27, %s28
      %p42 = scmp.eq.s32.totalorder %s20, 1
      %p43 = por %p41, %p42
      %p45 = scmp.ne.s32.totalorder %s28, %s44
      %p46 = scmp.eq.s32.totalorder %s20, 0
      %p47 = por %p45, %p46
      %s48 = ssub.s32 %s14, %s21
      %p49 = scmp.eq.s32.totalorder %s48, 0
      %s51 = sadd.s32 %s50, 1
      %s52 = scalar_select %p49, %s50, %s51
      %p55 = pneg %p49
      %p56 = scmp.eq.s32.totalorder %s14, 1
      %p57 = por %p55, %p56
      %p58 = scmp.ne.s32.totalorder %s50, %s53
      %p59 = scmp.eq.s32.totalorder %s14, 0
      %p60 = por %p58, %p59
      %p61 = scmp.ne.s32.totalorder %s50, %s53
      %p62 = scmp.eq.s32.totalorder %s19, 1
      %p63 = por %p61, %p62
      %p64 = scmp.ne.s32.totalorder %s53, %s54
      %p65 = scmp.eq.s32.totalorder %s19, 0
      %p66 = por %p64, %p65
      %p67 = scmp.ne.s32.totalorder %s53, %s54
      %p68 = scmp.eq.s32.totalorder %s20, 1
      %p69 = por %p67, %p68
      %p71 = scmp.ne.s32.totalorder %s54, %s70
      %p72 = scmp.eq.s32.totalorder %s20, 0
      %p73 = por %p71, %p72
      %s75 = sadd.s32 %s74, 1
      %p78 = scmp.eq.s32.totalorder %s14, 1
      %p79 = scmp.ne.s32.totalorder %s74, %s76
      %p80 = scmp.eq.s32.totalorder %s14, 0
      %p81 = por %p79, %p80
      %p82 = scmp.ne.s32.totalorder %s74, %s76
      %p83 = scmp.eq.s32.totalorder %s19, 1
      %p84 = por %p82, %p83
      %p85 = scmp.ne.s32.totalorder %s76, %s77
      %p86 = scmp.eq.s32.totalorder %s19, 0
      %p87 = por %p85, %p86
      %p88 = scmp.ne.s32.totalorder %s76, %s77
      %p89 = scmp.eq.s32.totalorder %s20, 1
      %p90 = por %p88, %p89
      %p92 = scmp.ne.s32.totalorder %s77, %s91
      %p93 = scmp.eq.s32.totalorder %s20, 0
      %p94 = por %p92, %p93
      %s96 = sadd.s32 %s95, 1
      %p99 = scmp.eq.s32.totalorder %s14, 1
      %p100 = scmp.ne.s32.totalorder %s95, %s97
      %p101 = scmp.eq.s32.totalorder %s14, 0
      %p102 = por %p100, %p101
      %p103 = scmp.ne.s32.totalorder %s95, %s97
      %p104 = scmp.eq.s32.totalorder %s19, 1
      %p105 = por %p103, %p104
      %p106 = scmp.ne.s32.totalorder %s97, %s98
      %p107 = scmp.eq.s32.totalorder %s19, 0
      %p108 = por %p106, %p107
      %p109 = scmp.ne.s32.totalorder %s97, %s98
      %p110 = scmp.eq.s32.totalorder %s20, 1
      %p111 = por %p109, %p110
      %p113 = scmp.ne.s32.totalorder %s98, %s112
      %p114 = scmp.eq.s32.totalorder %s20, 0
      %p115 = por %p113, %p114
      %s117 = sadd.s32 %s116, 1
      %p120 = scmp.eq.s32.totalorder %s14, 1
      %p121 = scmp.ne.s32.totalorder %s116, %s118
      %p122 = scmp.eq.s32.totalorder %s14, 0
      %p123 = por %p121, %p122
      %p124 = scmp.ne.s32.totalorder %s116, %s118
      %p125 = scmp.eq.s32.totalorder %s19, 1
      %p126 = por %p124, %p125
      %p127 = scmp.ne.s32.totalorder %s118, %s119
      %p128 = scmp.eq.s32.totalorder %s19, 0
      %p129 = por %p127, %p128
      %p130 = scmp.ne.s32.totalorder %s118, %s119
      %p131 = scmp.eq.s32.totalorder %s20, 1
      %p132 = por %p130, %p131
      %p134 = scmp.ne.s32.totalorder %s119, %s133
      %p135 = scmp.eq.s32.totalorder %s20, 0
      %p136 = por %p134, %p135
      %s137 = ssub.s32 %s14, %s21
      %p138 = scmp.eq.s32.totalorder %s137, 0
      %s140 = sadd.s32 %s139, 1
      %s141 = scalar_select %p138, %s139, %s140
      %p144 = pneg %p138
      %p145 = scmp.eq.s32.totalorder %s14, 1
      %p146 = por %p144, %p145
      %p147 = scmp.ne.s32.totalorder %s139, %s142
      %p148 = scmp.eq.s32.totalorder %s14, 0
      %p149 = por %p147, %p148
      %p150 = scmp.ne.s32.totalorder %s139, %s142
      %p151 = scmp.eq.s32.totalorder %s19, 1
      %p152 = por %p150, %p151
      %p153 = scmp.ne.s32.totalorder %s142, %s143
      %p154 = scmp.eq.s32.totalorder %s19, 0
      %p155 = por %p153, %p154
      %p156 = scmp.ne.s32.totalorder %s142, %s143
      %p157 = scmp.eq.s32.totalorder %s20, 1
      %p158 = por %p156, %p157
      %p160 = scmp.ne.s32.totalorder %s143, %s159
      %p161 = scmp.eq.s32.totalorder %s20, 0
      %p162 = por %p160, %p161
      %p163 = scmp.le.s32.totalorder 1, %s14
      %p164 = scmp.lt.s32.totalorder %s14, 3
      %p165 = pnand %p163, %p164
      %p166 = pneg %p165
      // Predicated region
      $region9: #{tpu_custom_call.1} parent=5 // pred_check
        _
      $region10: #{tpu_custom_call.1} parent=5 // pred_check_branch
        %168 = sbr.rel (%p165) target = $region12
      $region11: #{tpu_custom_call.1} parent=5 // pred_region
        %s169 = ssub.s32 %s14, 1
        // Predicated region
        $region13: #{tpu_custom_call.1} parent=11 // pred_check
          %p170 = pneg %p87
        $region14: #{tpu_custom_call.1} parent=11 // pred_check_branch
          %172 = sbr.rel (%p170) target = $region16
        $region15: #{tpu_custom_call.1} parent=11 // pred_region
          _
        $region16: #{tpu_custom_call.1} parent=11 // pred_fallthru
          _
        // Predicated region
        $region17: #{tpu_custom_call.1} parent=11 // pred_check
          %p173 = pneg %p108
        $region18: #{tpu_custom_call.1} parent=11 // pred_check_branch
          %175 = sbr.rel (%p173) target = $region20
        $region19: #{tpu_custom_call.1} parent=11 // pred_region
          _
        $region20: #{tpu_custom_call.1} parent=11 // pred_fallthru
          _
        // Predicated region
        $region21: #{tpu_custom_call.1} parent=11 // pred_check
          %p176 = pneg %p129
        $region22: #{tpu_custom_call.1} parent=11 // pred_check_branch
          %178 = sbr.rel (%p176) target = $region24
        $region23: #{tpu_custom_call.1} parent=11 // pred_region
          _
        $region24: #{tpu_custom_call.1} parent=11 // pred_fallthru
          _
      $region12: #{tpu_custom_call.1} parent=5 // pred_fallthru
        _
      %p179 = scmp.lt.s32.totalorder %s14, 2
      // Predicated region
      $region25: #{tpu_custom_call.1} parent=5 // pred_check
        %p180 = pneg %p179
      $region26: #{tpu_custom_call.1} parent=5 // pred_check_branch
        %182 = sbr.rel (%p180) target = $region28
      $region27: #{tpu_custom_call.1} parent=5 // pred_region
        // Predicated region
        $region29: #{tpu_custom_call.1} parent=27 // pred_check
          %p183 = pneg %p34
        $region30: #{tpu_custom_call.1} parent=27 // pred_check_branch
          %185 = sbr.rel (%p183) target = $region32
        $region31: #{tpu_custom_call.1} parent=27 // pred_region
          %p186 = scmp.lt.s32.totalorder %s14, 1
          %s187 = scalar_select %p186, %s14, 1
          %s188 = smul.addr %s187, 8
          %s189 = scalar_lea.vmem %s0, %s188
        $region32: #{tpu_custom_call.1} parent=27 // pred_fallthru
          _
        // Predicated region
        $region33: #{tpu_custom_call.1} parent=27 // pred_check
          %p190 = pneg %p60
        $region34: #{tpu_custom_call.1} parent=27 // pred_check_branch
          %192 = sbr.rel (%p190) target = $region36
        $region35: #{tpu_custom_call.1} parent=27 // pred_region
          %s193 = sand.u32 %s50, 1
          %s194 = sand.u32 %s50, 1
          %s195 = smul.addr %s194, 32
          %s196 = scalar_lea.vmem [#allocation2], %s195
          %s197 = smul.addr %s14, 8
          %s198 = scalar_lea.vmem %s1, %s197
          // Predicated region
          $region37: #{tpu_custom_call.1} parent=35 // pred_check
            _
          $region38: #{tpu_custom_call.1} parent=35 // pred_check_branch
            %200 = sbr.rel (0) target = $region40
          $region39: #{tpu_custom_call.1} parent=35 // pred_region
            // Predicated region
            $region41: #{tpu_custom_call.1} parent=39 // pred_check
              _
            $region42: #{tpu_custom_call.1} parent=39 // pred_check_branch
              %202 = sbr.rel (0) target = $region44
            $region43: #{tpu_custom_call.1} parent=39 // pred_region
              // Predicated region
              $region56: #{tpu_custom_call.1} parent=43 // pred_check
                _
              $region57: #{tpu_custom_call.1} parent=43 // pred_check_branch
                %223 = sbr.rel (0) target = $region59
              $region58: #{tpu_custom_call.1} parent=43 // pred_region
                loop: start=0, step=1, limit=1
                $region60: #{tpu_custom_call.1} parent=58 // loop_pre_header
                  _
                $region61: #{tpu_custom_call.1} parent=58 // loop_header
                  %s225 = sphi 0, %s229
                  %p226 = scmp.ge.s32.totalorder %s225, 1
                  %s230 = sphi %s198, %s198
                  %s231 = sphi %s196, %s196
                $region62: #{tpu_custom_call.1} parent=58 // loop_header_branch
                  %228 = sbr.rel (%p226) target = $region66
                $region63: #{tpu_custom_call.1} parent=58 // loop_body
                  %v232 = vld [vmem:[%s230] sm:$0xff]
                  %233 = vst [vmem:[%s231] sm:$0xff] %v232
                  %v234 = vld [vmem:[%s230 + $0x10] sm:$0xff]
                  %235 = vst [vmem:[%s231 + $0x8] sm:$0xff] %v234
                  %v236 = vld [vmem:[%s230 + $0x20] sm:$0xff]
                  %237 = vst [vmem:[%s231 + $0x10] sm:$0xff] %v236
                  %v238 = vld [vmem:[%s230 + $0x30] sm:$0xff]
                  %239 = vst [vmem:[%s231 + $0x18] sm:$0xff] %v238
                $region64: #{tpu_custom_call.1} parent=58 // loop_footer
                  %s229 = sadd.s32 1, %s225
                $region65: #{tpu_custom_call.1} parent=58 // loop_footer_branch
                  %224 = sbr.rel target = $region61
                $region66: #{tpu_custom_call.1} parent=58 // loop_exit
                  _
              $region59: #{tpu_custom_call.1} parent=43 // pred_fallthru
                _
              // Predicated region
              $region67: #{tpu_custom_call.1} parent=43 // pred_check
                _
              $region68: #{tpu_custom_call.1} parent=43 // pred_check_branch
                %241 = sbr.rel target = $region70
              $region69: #{tpu_custom_call.1} parent=43 // pred_region
                _
              $region70: #{tpu_custom_call.1} parent=43 // pred_fallthru
                _
            $region44: #{tpu_custom_call.1} parent=39 // pred_fallthru
              _
            // Predicated region
            $region45: #{tpu_custom_call.1} parent=39 // pred_check
              _
            $region46: #{tpu_custom_call.1} parent=39 // pred_check_branch
              %204 = sbr.rel target = $region48
            $region47: #{tpu_custom_call.1} parent=39 // pred_region
              loop: start=0, step=1, limit=1
              $region49: #{tpu_custom_call.1} parent=47 // loop_pre_header
                _
              $region50: #{tpu_custom_call.1} parent=47 // loop_header
                %s207 = sphi 0, %s211
                %p208 = scmp.ge.s32.totalorder %s207, 1
                %s212 = sphi %s198, %s198
                %s213 = sphi %s196, %s196
              $region51: #{tpu_custom_call.1} parent=47 // loop_header_branch
                %210 = sbr.rel (%p208) target = $region55
              $region52: #{tpu_custom_call.1} parent=47 // loop_body
                %v214 = vld [vmem:[%s212] sm:$0xff]
                %215 = vst [vmem:[%s213] sm:$0xff] %v214
                %v216 = vld [vmem:[%s212 + $0x10] sm:$0xff]
                %217 = vst [vmem:[%s213 + $0x8] sm:$0xff] %v216
                %v218 = vld [vmem:[%s212 + $0x20] sm:$0xff]
                %219 = vst [vmem:[%s213 + $0x10] sm:$0xff] %v218
                %v220 = vld [vmem:[%s212 + $0x30] sm:$0xff]
                %221 = vst [vmem:[%s213 + $0x18] sm:$0xff] %v220
              $region53: #{tpu_custom_call.1} parent=47 // loop_footer
                %s211 = sadd.s32 1, %s207
              $region54: #{tpu_custom_call.1} parent=47 // loop_footer_branch
                %206 = sbr.rel target = $region50
              $region55: #{tpu_custom_call.1} parent=47 // loop_exit
                _
            $region48: #{tpu_custom_call.1} parent=39 // pred_fallthru
              _
          $region40: #{tpu_custom_call.1} parent=35 // pred_fallthru
            _
          %242 = vnop
        $region36: #{tpu_custom_call.1} parent=27 // pred_fallthru
          _
      $region28: #{tpu_custom_call.1} parent=5 // pred_fallthru
        _
      %p243 = scmp.le.s32.totalorder 1, %s14
      %p244 = scmp.lt.s32.totalorder %s14, 3
      %p245 = pnand %p243, %p244
      %p246 = pneg %p245
      // Predicated region
      $region71: #{tpu_custom_call.1} parent=5 // pred_check
        _
      $region72: #{tpu_custom_call.1} parent=5 // pred_check_branch
        %248 = sbr.rel (%p245) target = $region74
      $region73: #{tpu_custom_call.1} parent=5 // pred_region
        %s249 = ssub.s32 %s14, 1
        %s250 = sand.u32 %s53, 1
        %s251 = sand.u32 %s53, 1
        %s252 = smul.addr %s251, 32
        %s253 = scalar_lea.vmem [#allocation2], %s252
        // Predicated region
        $region75: #{tpu_custom_call.1} parent=73 // pred_check
          %p254 = pneg %p66
        $region76: #{tpu_custom_call.1} parent=73 // pred_check_branch
          %256 = sbr.rel (%p254) target = $region78
        $region77: #{tpu_custom_call.1} parent=73 // pred_region
          _
        $region78: #{tpu_custom_call.1} parent=73 // pred_fallthru
          _
        %p257 = scmp.lt.s32.totalorder %s19, 1
        %s258 = scalar_select %p257, %s19, 1
        %s259 = smul.addr %s258, 8
        %s260 = scalar_lea.vmem %s0, %s259
        %p261 = pneg %p40
        %p262 = pneg %p37
        %s263 = sand.u32 %s53, 1
        %s264 = sand.u32 %s53, 1
        %s265 = smul.addr %s264, 32
        %s266 = scalar_lea.vmem [#allocation2], %s265
        %p267 = pneg %p66
        %p268 = pneg %p63
        %p269 = pneg %p87
        %p270 = pneg %p84
        %p271 = pneg %p108
        %p272 = pneg %p105
        %p273 = pneg %p129
        %p274 = pneg %p126
        %p275 = pneg %p155
        %p276 = pneg %p152
        %s277 = sand.u32 %s142, 1
        %s278 = scalar_lea.sflag [#allocation4], %s277
        %s279 = sand.u32 %s142, 1
        %s280 = smul.addr %s279, 8
        %s281 = scalar_lea.vmem [#allocation3], %s280
        %p282 = scmp.lt.s32.totalorder %s19, 1
        %s283 = scalar_select %p282, %s19, 1
        %s284 = smul.addr %s283, 8
        %s285 = scalar_lea.vmem %s0, %s284
        %v286 = vld [vmem:[%s285] sm:$0xff]
        %v287 = vld [vmem:[%s4] sm:$0xf]
        %v288 = vld [vmem:[%s2] sm:$0xff]
        %v289 = vld [vmem:[%s2 + $0x8] sm:$0xff]
        %v290 = vld [vmem:[%s2 + $0x10] sm:$0xff]
        %v291 = vld [vmem:[%s2 + $0x18] sm:$0xff]
        %vm292 = vcmask 261120
        %v294 = vsel %vm292, %v286, 0
        %296 = vmatprep.subr.mxu0 0.0
        %297 = vmatpush1.msra.mxu0 %v288
        %298 = vmatprep.subr.mxu0 0.0
        %299 = vmatpush1.msra.mxu0 %v289
        %300 = vmatprep.subr.mxu0 0.0
        %301 = vmatpush1.msra.mxu0 %v290
        %302 = vmatprep.subr.mxu0 0.0
        %303 = vmatpush1.msra.mxu0 %v291
        %304 = vmatprep.subr.mxu0 0.0
        %305 = vmatpush1.msra.mxu0 0.0
        %306 = vmatprep.subr.mxu0 0.0
        %307 = vmatpush1.msra.mxu0 0.0
        %308 = vmatprep.subr.mxu0 0.0
        %309 = vmatpush1.msra.mxu0 0.0
        %310 = vmatprep.subr.mxu0 0.0
        %311 = vmatpush1.msra.mxu0 0.0
        %312 = vmatprep.subr.mxu0 0.0
        %313 = vmatpush1.msra.mxu0 0.0
        %314 = vmatprep.subr.mxu0 0.0
        %315 = vmatpush1.msra.mxu0 0.0
        %316 = vmatprep.subr.mxu0 0.0
        %317 = vmatpush1.msra.mxu0 0.0
        %318 = vmatprep.subr.mxu0 0.0
        %319 = vmatpush1.msra.mxu0 0.0
        %320 = vmatprep.subr.mxu0 0.0
        %321 = vmatpush1.msra.mxu0 0.0
        %322 = vmatprep.subr.mxu0 0.0
        %323 = vmatpush1.msra.mxu0 0.0
        %324 = vmatprep.subr.mxu0 0.0
        %325 = vmatpush1.msra.mxu0 0.0
        %326 = vmatprep.subr.mxu0 0.0
        %327 = vmatpush1.msra.mxu0 0.0
        %328 = vmatprep.subr.mxu0 0.0
        %329 = vmatpush1.msra.mxu0 0.0
        %330 = vmatprep.subr.mxu0 0.0
        %331 = vmatpush1.msra.mxu0 0.0
        %332 = vmatprep.subr.mxu0 0.0
        %333 = vmatpush1.msra.mxu0 0.0
        %334 = vmatprep.subr.mxu0 0.0
        %335 = vmatpush1.msra.mxu0 0.0
        %336 = vmatprep.subr.mxu0 0.0
        %337 = vmatpush1.msra.mxu0 0.0
        %338 = vmatprep.subr.mxu0 0.0
        %339 = vmatpush1.msra.mxu0 0.0
        %340 = vmatprep.subr.mxu0 0.0
        %341 = vmatpush1.msra.mxu0 0.0
        %342 = vmatprep.subr.mxu0 0.0
        %343 = vmatpush1.msra.mxu0 0.0
        %344 = vmatprep.subr.mxu0 0.0
        %345 = vmatpush1.msra.mxu0 0.0
        %346 = vmatprep.subr.mxu0 0.0
        %347 = vmatpush1.msra.mxu0 0.0
        %348 = vmatprep.subr.mxu0 0.0
        %349 = vmatpush1.msra.mxu0 0.0
        %350 = vmatprep.subr.mxu0 0.0
        %351 = vmatpush1.msra.mxu0 0.0
        %352 = vmatprep.subr.mxu0 0.0
        %353 = vmatpush1.msra.mxu0 0.0
        %354 = vmatprep.subr.mxu0 0.0
        %355 = vmatpush1.msra.mxu0 0.0
        %356 = vmatprep.subr.mxu0 0.0
        %357 = vmatpush1.msra.mxu0 0.0
        %358 = vmatprep.subr.mxu0 0.0
        %359 = vmatpush1.msra.mxu0 0.0
        %360 = vmatprep.mubr.f32.mxu0 0.0
        %361 = vmatmul.mubr.f32.gmra.mrb[0].mxu0 %v294
        %v362 = vpop.f32.mrb[0].mxu0
        %v363 = vadd.f32 0.0, %v362
        %v364 = vpop.f32.mrb[0].mxu0
        %365 = vdwg.mxu0
        %v366 = vlaneseq
        %v367 = vshrl.u32 %v366, 7
        %v368 = vsub.s32 0, %v367
        %v369 = vrot.slane %v287, %v368
        %v370 = vadd.f32 %v363, %v369
        %v371 = vld [vmem:[%s253] sm:$0xff]
        %v372 = vadd.f32 %v370, %v371
        %v373 = vmax.f32 %v372, 0.0
        %s374 = scalar_lea.vmem %s253, 8 [#allocation2]
        %v375 = vld [vmem:[%s374] sm:$0xff]
        %v376 = vadd.f32 %v370, %v375
        %v377 = vmax.f32 %v376, 0.0
        %v378 = vadd.f32 %v373, %v377
        %s379 = scalar_lea.vmem %s253, 16 [#allocation2]
        %v380 = vld [vmem:[%s379] sm:$0xff]
        %v381 = vadd.f32 %v370, %v380
        %v382 = vmax.f32 %v381, 0.0
        %v383 = vadd.f32 %v378, %v382
        %s384 = scalar_lea.vmem %s253, 24 [#allocation2]
        %v385 = vld [vmem:[%s384] sm:$0xff]
        %v386 = vadd.f32 %v370, %v385
        %v387 = vmax.f32 %v386, 0.0
        %v388 = vadd.f32 %v383, %v387
        %v389 = vld [vmem:[%s3] sm:$0xff]
        %v390 = vld [vmem:[%s3 + $0x8] sm:$0xff]
        %v391 = vld [vmem:[%s3 + $0x10] sm:$0xff]
        %v392 = vld [vmem:[%s3 + $0x18] sm:$0xff]
        %v393 = vlaneseq
        %v394 = vshrl.u32 %v393, 7
        %v395 = vsub.s32 1, %v394
        %v396 = vrot.slane %v287, %v395
        %v398 = vsel %vm292, %v388, 0
        %400 = vmatprep.subr.mxu0 0.0
        %401 = vmatpush1.msra.mxu0 %v389
        %402 = vmatprep.subr.mxu0 0.0
        %403 = vmatpush1.msra.mxu0 %v390
        %404 = vmatprep.subr.mxu0 0.0
        %405 = vmatpush1.msra.mxu0 %v391
        %406 = vmatprep.subr.mxu0 0.0
        %407 = vmatpush1.msra.mxu0 %v392
        %408 = vmatprep.subr.mxu0 0.0
        %409 = vmatpush1.msra.mxu0 0.0
        %410 = vmatprep.subr.mxu0 0.0
        %411 = vmatpush1.msra.mxu0 0.0
        %412 = vmatprep.subr.mxu0 0.0
        %413 = vmatpush1.msra.mxu0 0.0
        %414 = vmatprep.subr.mxu0 0.0
        %415 = vmatpush1.msra.mxu0 0.0
        %416 = vmatprep.subr.mxu0 0.0
        %417 = vmatpush1.msra.mxu0 0.0
        %418 = vmatprep.subr.mxu0 0.0
        %419 = vmatpush1.msra.mxu0 0.0
        %420 = vmatprep.subr.mxu0 0.0
        %421 = vmatpush1.msra.mxu0 0.0
        %422 = vmatprep.subr.mxu0 0.0
        %423 = vmatpush1.msra.mxu0 0.0
        %424 = vmatprep.subr.mxu0 0.0
        %425 = vmatpush1.msra.mxu0 0.0
        %426 = vmatprep.subr.mxu0 0.0
        %427 = vmatpush1.msra.mxu0 0.0
        %428 = vmatprep.subr.mxu0 0.0
        %429 = vmatpush1.msra.mxu0 0.0
        %430 = vmatprep.subr.mxu0 0.0
        %431 = vmatpush1.msra.mxu0 0.0
        %432 = vmatprep.subr.mxu0 0.0
        %433 = vmatpush1.msra.mxu0 0.0
        %434 = vmatprep.subr.mxu0 0.0
        %435 = vmatpush1.msra.mxu0 0.0
        %436 = vmatprep.subr.mxu0 0.0
        %437 = vmatpush1.msra.mxu0 0.0
        %438 = vmatprep.subr.mxu0 0.0
        %439 = vmatpush1.msra.mxu0 0.0
        %440 = vmatprep.subr.mxu0 0.0
        %441 = vmatpush1.msra.mxu0 0.0
        %442 = vmatprep.subr.mxu0 0.0
        %443 = vmatpush1.msra.mxu0 0.0
        %444 = vmatprep.subr.mxu0 0.0
        %445 = vmatpush1.msra.mxu0 0.0
        %446 = vmatprep.subr.mxu0 0.0
        %447 = vmatpush1.msra.mxu0 0.0
        %448 = vmatprep.subr.mxu0 0.0
        %449 = vmatpush1.msra.mxu0 0.0
        %450 = vmatprep.subr.mxu0 0.0
        %451 = vmatpush1.msra.mxu0 0.0
        %452 = vmatprep.subr.mxu0 0.0
        %453 = vmatpush1.msra.mxu0 0.0
        %454 = vmatprep.subr.mxu0 0.0
        %455 = vmatpush1.msra.mxu0 0.0
        %456 = vmatprep.subr.mxu0 0.0
        %457 = vmatpush1.msra.mxu0 0.0
        %458 = vmatprep.subr.mxu0 0.0
        %459 = vmatpush1.msra.mxu0 0.0
        %460 = vmatprep.subr.mxu0 0.0
        %461 = vmatpush1.msra.mxu0 0.0
        %462 = vmatprep.subr.mxu0 0.0
        %463 = vmatpush1.msra.mxu0 0.0
        %464 = vmatprep.mubr.f32.mxu0 0.0
        %465 = vmatmul.mubr.f32.gmra.mrb[0].mxu0 %v398
        %v466 = vpop.f32.mrb[0].mxu0
        %v467 = vadd.f32 %v396, %v466
        %v468 = vpop.f32.mrb[0].mxu0
        %469 = vdwg.mxu0
        %v470 = vld [vmem:[%s3 + $0x20] sm:$0xff]
        %v471 = vld [vmem:[%s3 + $0x28] sm:$0xff]
        %v472 = vld [vmem:[%s3 + $0x30] sm:$0xff]
        %v473 = vld [vmem:[%s3 + $0x38] sm:$0xff]
        %v475 = vsel %vm292, %v467, 0
        %477 = vmatprep.subr.mxu0 0.0
        %478 = vmatpush1.msra.mxu0 %v470
        %479 = vmatprep.subr.mxu0 0.0
        %480 = vmatpush1.msra.mxu0 %v471
        %481 = vmatprep.subr.mxu0 0.0
        %482 = vmatpush1.msra.mxu0 %v472
        %483 = vmatprep.subr.mxu0 0.0
        %484 = vmatpush1.msra.mxu0 %v473
        %485 = vmatprep.subr.mxu0 0.0
        %486 = vmatpush1.msra.mxu0 0.0
        %487 = vmatprep.subr.mxu0 0.0
        %488 = vmatpush1.msra.mxu0 0.0
        %489 = vmatprep.subr.mxu0 0.0
        %490 = vmatpush1.msra.mxu0 0.0
        %491 = vmatprep.subr.mxu0 0.0
        %492 = vmatpush1.msra.mxu0 0.0
        %493 = vmatprep.subr.mxu0 0.0
        %494 = vmatpush1.msra.mxu0 0.0
        %495 = vmatprep.subr.mxu0 0.0
        %496 = vmatpush1.msra.mxu0 0.0
        %497 = vmatprep.subr.mxu0 0.0
        %498 = vmatpush1.msra.mxu0 0.0
        %499 = vmatprep.subr.mxu0 0.0
        %500 = vmatpush1.msra.mxu0 0.0
        %501 = vmatprep.subr.mxu0 0.0
        %502 = vmatpush1.msra.mxu0 0.0
        %503 = vmatprep.subr.mxu0 0.0
        %504 = vmatpush1.msra.mxu0 0.0
        %505 = vmatprep.subr.mxu0 0.0
        %506 = vmatpush1.msra.mxu0 0.0
        %507 = vmatprep.subr.mxu0 0.0
        %508 = vmatpush1.msra.mxu0 0.0
        %509 = vmatprep.subr.mxu0 0.0
        %510 = vmatpush1.msra.mxu0 0.0
        %511 = vmatprep.subr.mxu0 0.0
        %512 = vmatpush1.msra.mxu0 0.0
        %513 = vmatprep.subr.mxu0 0.0
        %514 = vmatpush1.msra.mxu0 0.0
        %515 = vmatprep.subr.mxu0 0.0
        %516 = vmatpush1.msra.mxu0 0.0
        %517 = vmatprep.subr.mxu0 0.0
        %518 = vmatpush1.msra.mxu0 0.0
        %519 = vmatprep.subr.mxu0 0.0
        %520 = vmatpush1.msra.mxu0 0.0
        %521 = vmatprep.subr.mxu0 0.0
        %522 = vmatpush1.msra.mxu0 0.0
        %523 = vmatprep.subr.mxu0 0.0
        %524 = vmatpush1.msra.mxu0 0.0
        %525 = vmatprep.subr.mxu0 0.0
        %526 = vmatpush1.msra.mxu0 0.0
        %527 = vmatprep.subr.mxu0 0.0
        %528 = vmatpush1.msra.mxu0 0.0
        %529 = vmatprep.subr.mxu0 0.0
        %530 = vmatpush1.msra.mxu0 0.0
        %531 = vmatprep.subr.mxu0 0.0
        %532 = vmatpush1.msra.mxu0 0.0
        %533 = vmatprep.subr.mxu0 0.0
        %534 = vmatpush1.msra.mxu0 0.0
        %535 = vmatprep.subr.mxu0 0.0
        %536 = vmatpush1.msra.mxu0 0.0
        %537 = vmatprep.subr.mxu0 0.0
        %538 = vmatpush1.msra.mxu0 0.0
        %539 = vmatprep.subr.mxu0 0.0
        %540 = vmatpush1.msra.mxu0 0.0
        %541 = vmatprep.mubr.f32.mxu0 0.0
        %542 = vmatmul.mubr.f32.gmra.mrb[0].mxu0 %v475
        %v543 = vpop.f32.mrb[0].mxu0
        %v544 = vadd.f32 0.0, %v543
        %v545 = vpop.f32.mrb[0].mxu0
        %546 = vdwg.mxu0
        %548 = vrot.lane.b32.xlu0 %v544, 32
        %v549 = vpop.permute.xlu0 %548
        %v551 = vadd.f32 %v363, %v549
        %v552 = vlaneseq
        %v553 = vshrl.u32 %v552, 7
        %v554 = vsub.s32 2, %v553
        %v555 = vrot.slane %v287, %v554
        %557 = vrot.lane.b32.xlu0 %v555, 32
        %v558 = vpop.permute.xlu0 %557
        %v560 = vadd.f32 %v551, %v558
        %v561 = vmax.f32 %v560, 0.0
        %v562 = vld [vmem:[%s3 + $0x40] sm:$0xff]
        %v563 = vld [vmem:[%s3 + $0x48] sm:$0xff]
        %v564 = vld [vmem:[%s3 + $0x50] sm:$0xff]
        %v565 = vld [vmem:[%s3 + $0x58] sm:$0xff]
        %v566 = vlaneseq
        %v567 = vshrl.u32 %v566, 7
        %v568 = vsub.s32 3, %v567
        %v569 = vrot.slane %v287, %v568
        %571 = vrot.lane.b32.xlu0 %v561, 96
        %v572 = vpop.permute.xlu0 %571
        %v573 = vsel %vm292, %v572, 0
        %575 = vmatprep.subr.mxu0 0.0
        %576 = vmatpush1.msra.mxu0 %v562
        %577 = vmatprep.subr.mxu0 0.0
        %578 = vmatpush1.msra.mxu0 %v563
        %579 = vmatprep.subr.mxu0 0.0
        %580 = vmatpush1.msra.mxu0 %v564
        %581 = vmatprep.subr.mxu0 0.0
        %582 = vmatpush1.msra.mxu0 %v565
        %583 = vmatprep.subr.mxu0 0.0
        %584 = vmatpush1.msra.mxu0 0.0
        %585 = vmatprep.subr.mxu0 0.0
        %586 = vmatpush1.msra.mxu0 0.0
        %587 = vmatprep.subr.mxu0 0.0
        %588 = vmatpush1.msra.mxu0 0.0
        %589 = vmatprep.subr.mxu0 0.0
        %590 = vmatpush1.msra.mxu0 0.0
        %591 = vmatprep.subr.mxu0 0.0
        %592 = vmatpush1.msra.mxu0 0.0
        %593 = vmatprep.subr.mxu0 0.0
        %594 = vmatpush1.msra.mxu0 0.0
        %595 = vmatprep.subr.mxu0 0.0
        %596 = vmatpush1.msra.mxu0 0.0
        %597 = vmatprep.subr.mxu0 0.0
        %598 = vmatpush1.msra.mxu0 0.0
        %599 = vmatprep.subr.mxu0 0.0
        %600 = vmatpush1.msra.mxu0 0.0
        %601 = vmatprep.subr.mxu0 0.0
        %602 = vmatpush1.msra.mxu0 0.0
        %603 = vmatprep.subr.mxu0 0.0
        %604 = vmatpush1.msra.mxu0 0.0
        %605 = vmatprep.subr.mxu0 0.0
        %606 = vmatpush1.msra.mxu0 0.0
        %607 = vmatprep.subr.mxu0 0.0
        %608 = vmatpush1.msra.mxu0 0.0
        %609 = vmatprep.subr.mxu0 0.0
        %610 = vmatpush1.msra.mxu0 0.0
        %611 = vmatprep.subr.mxu0 0.0
        %612 = vmatpush1.msra.mxu0 0.0
        %613 = vmatprep.subr.mxu0 0.0
        %614 = vmatpush1.msra.mxu0 0.0
        %615 = vmatprep.subr.mxu0 0.0
        %616 = vmatpush1.msra.mxu0 0.0
        %617 = vmatprep.subr.mxu0 0.0
        %618 = vmatpush1.msra.mxu0 0.0
        %619 = vmatprep.subr.mxu0 0.0
        %620 = vmatpush1.msra.mxu0 0.0
        %621 = vmatprep.subr.mxu0 0.0
        %622 = vmatpush1.msra.mxu0 0.0
        %623 = vmatprep.subr.mxu0 0.0
        %624 = vmatpush1.msra.mxu0 0.0
        %625 = vmatprep.subr.mxu0 0.0
        %626 = vmatpush1.msra.mxu0 0.0
        %627 = vmatprep.subr.mxu0 0.0
        %628 = vmatpush1.msra.mxu0 0.0
        %629 = vmatprep.subr.mxu0 0.0
        %630 = vmatpush1.msra.mxu0 0.0
        %631 = vmatprep.subr.mxu0 0.0
        %632 = vmatpush1.msra.mxu0 0.0
        %633 = vmatprep.subr.mxu0 0.0
        %634 = vmatpush1.msra.mxu0 0.0
        %635 = vmatprep.subr.mxu0 0.0
        %636 = vmatpush1.msra.mxu0 0.0
        %637 = vmatprep.subr.mxu0 0.0
        %638 = vmatpush1.msra.mxu0 0.0
        %639 = vmatprep.mubr.f32.mxu0 0.0
        %640 = vmatmul.mubr.f32.gmra.mrb[0].mxu0 %v573
        %v641 = vpop.f32.mrb[0].mxu0
        %v642 = vadd.f32 %v569, %v641
        %v643 = vpop.f32.mrb[0].mxu0
        %644 = vdwg.mxu0
        %v645 = vadd.f32 %v286, %v642
        %v646 = vmax.f32 %v645, 0.0
        %647 = vst.msk [vmem:[%s281] sm:$0xff] %vm292, %v646
        %s648 = sand.u32 %s142, 1
        %s649 = scalar_lea.sflag [#allocation4], %s648
        %s650 = sand.u32 %s142, 1
        %s651 = smul.addr %s650, 8
        %s652 = scalar_lea.vmem [#allocation3], %s651
        // Predicated region
        $region79: #{tpu_custom_call.1} parent=73 // pred_check
          %p653 = pneg %p152
        $region80: #{tpu_custom_call.1} parent=73 // pred_check_branch
          %655 = sbr.rel (%p653) target = $region82
        $region81: #{tpu_custom_call.1} parent=73 // pred_region
          %s657 = ssub.s32 128, 128
          %658 = vsyncadd %s649, %s657
          %s659 = smul.addr %s19, 128
          %s660 = scalar_lea.hbm %s5, %s659
          %s662 = sshll.u32 %s652, 4
          %s663 = int_to_ptr.vmem [resolvable:$true] %s662
          %665 = dma.vmem_to_hbm [thread:$0]  %s663, 128, %s660, %s649
        $region82: #{tpu_custom_call.1} parent=73 // pred_fallthru
          _
      $region74: #{tpu_custom_call.1} parent=5 // pred_fallthru
        _
      %p666 = scmp.le.s32.totalorder 2, %s14
      // Predicated region
      $region83: #{tpu_custom_call.1} parent=5 // pred_check
        %p667 = pneg %p666
      $region84: #{tpu_custom_call.1} parent=5 // pred_check_branch
        %669 = sbr.rel (%p667) target = $region86
      $region85: #{tpu_custom_call.1} parent=5 // pred_region
        %s670 = ssub.s32 %s14, 2
        // Predicated region
        $region87: #{tpu_custom_call.1} parent=85 // pred_check
          %p671 = pneg %p158
        $region88: #{tpu_custom_call.1} parent=85 // pred_check_branch
          %673 = sbr.rel (%p671) target = $region90
        $region89: #{tpu_custom_call.1} parent=85 // pred_region
          %s674 = sand.u32 %s143, 1
          %s675 = scalar_lea.sflag [#allocation4], %s674
          %s676 = sand.u32 %s143, 1
          %s677 = smul.addr %s676, 8
          %s678 = scalar_lea.vmem [#allocation3], %s677
          %679 = dma.done %s675, 128
        $region90: #{tpu_custom_call.1} parent=85 // pred_fallthru
          _
      $region86: #{tpu_custom_call.1} parent=5 // pred_fallthru
        _
    $region6: #{tpu_custom_call.1} parent=1 // loop_footer
      %s18 = sadd.s32 1, %s14
    $region7: #{tpu_custom_call.1} parent=1 // loop_footer_branch
      %13 = sbr.rel target = $region3
    $region8: #{tpu_custom_call.1} parent=1 // loop_exit
      _
    %680 = vsyncpa [#allocation4], 1
    %s681 = scalar_lea.sflag [#allocation4], 1
    %682 = vsyncpa %s681, 1

</llo_original>
